<compile_context>
chip_gen: v7x
topology: tpu7x:2x2x1
jax: 0.10.0
libtpu: 0.0.40
codegen_flags: <defaults>
</compile_context>

<pallas_src>
import functools

import jax
import jax.numpy as jnp
from jax.experimental import pallas as pl
from jax.experimental.pallas import tpu as pltpu


_VMEM_BUDGET = 40 * 1024 * 1024        # conservative: leaves headroom on v7x (64 MiB/TC)
_VMEM_LIMIT_BYTES = 48 * 1024 * 1024   # raise scoped limit (v5e default is 16 MiB)


def _gcn_kernel(x_ref, adj_ref, w_ref, b_ref, o_ref, *, n_nodes, apply_relu):
    # x_ref:   (TB*N, c_in)   node features of the TB packed graphs (f32)
    # adj_ref: (TB, TM, N)    adjacency row tile, bf16 0/1 (exact)
    # w_ref:   (c_in, c_out)  linear weight, pre-transposed (f32)
    # b_ref:   (1, c_out)     bias (added AFTER normalization; identity holds)
    # o_ref:   (TB, TM, c_out)
    tb = adj_ref.shape[0]
    w = w_ref[...]
    b = b_ref[...]

    # Packed projection: one (TB*N, c_in) @ (c_in, c_out) MXU matmul in f32
    # (x traffic is tiny vs adjacency; keeping it f32 keeps the projection
    # exact).  Cast the result to bf16 so the big aggregation matmul runs at
    # native bf16 MXU rate with f32 accumulation.
    proj = jnp.dot(x_ref[...], w, preferred_element_type=jnp.float32)
    proj = proj.astype(jnp.bfloat16)                       # (TB*N, c_out)

    # Per-graph aggregation (static unroll; TB is small).  Rank-2 dots only.
    for g in range(tb):
        adj_g = adj_ref[g]                                 # (TM, N) bf16
        proj_g = proj[g * n_nodes:(g + 1) * n_nodes]       # (N, c_out) bf16
        agg = jnp.dot(adj_g, proj_g,
                      preferred_element_type=jnp.float32)  # (TM, c_out) f32
        # Degree = row-sum over the FULL neighbor axis (not tiled), exact in f32.
        deg = jnp.sum(adj_g.astype(jnp.float32), axis=-1, keepdims=True)
        # Reciprocal runs on the EUP slot; deferred bias add.
        out = agg * pl.reciprocal(deg, approx=True) + b
        if apply_relu:
            out = jnp.maximum(out, 0.0)
        o_ref[g] = out.astype(o_ref.dtype)


def _choose_tiles(B, N, c_in, c_out):
    """Pick (TB graphs per step, TM adjacency rows per step)."""
    if N <= 256:
        # Small-graph regime: full rows, pack graphs so the packed projection
        # has ~256 rows for the MXU and per-step overhead amortizes.
        TM = N
        TB = max(1, min(B, 256 // max(N, 1)))
        while TB > 1 and 2 * TB * N * N * 2 > _VMEM_BUDGET // 2:
            TB -= 1
        return TB, TM
    # Large-graph regime: one graph per step, row-tile the adjacency so the
    # double-buffered bf16 tile (plus resident x / output) fits the budget.
    TB = 1
    fixed = 2 * N * c_in * 4 + 2 * c_in * c_out * 4        # resident x + weight
    avail = max(_VMEM_BUDGET - fixed, 4 * 1024 * 1024)
    per_row = 2 * (N * 2 + c_out * 4)                      # adj row (bf16) + out row (f32), 2 bufs
    TM = int(min(N, max(256, (avail // per_row) // 256 * 256)))
    return TB, TM


def gcn_layer(node_feats, adj_matrix, weight, bias, *, apply_relu=False):
    """One dense-adjacency GCN layer.

    node_feats: [B, N, c_in], adj_matrix: [B, N, N] (any float dtype; cast to
    bf16 internally), weight: [c_out, c_in] (PyTorch nn.Linear layout),
    bias: [c_out].
    """
    B, N, c_in = node_feats.shape
    c_out = weight.shape[0]

    TB, TM = _choose_tiles(B, N, c_in, c_out)
    # (8,128)-legality fallbacks: a block's last-two dims must be tile-aligned
    # or equal the full array dims.
    if (TB * N) % 8 != 0 and TB != B:
        TB = B
    if TM != N and TM % 16 != 0:  # bf16 adjacency sublane tile is 16
        TM = N

    x_flat = node_feats.reshape(B * N, c_in).astype(jnp.float32)
    adj_bf16 = adj_matrix.astype(jnp.bfloat16)   # no-op if already bf16
    w_t = weight.T.astype(jnp.float32)           # (c_in, c_out)
    b2 = bias.reshape(1, c_out).astype(jnp.float32)

    grid = (pl.cdiv(B, TB), pl.cdiv(N, TM))
    kernel = functools.partial(_gcn_kernel, n_nodes=N, apply_relu=apply_relu)

    return pl.pallas_call(
        kernel,
        out_shape=jax.ShapeDtypeStruct((B, N, c_out), node_feats.dtype),
        grid=grid,
        in_specs=[
            # x is resident across the row-tile axis (index map ignores ri).
            pl.BlockSpec((TB * N, c_in), lambda bi, ri: (bi, 0)),
            pl.BlockSpec((TB, TM, N), lambda bi, ri: (bi, ri, 0)),
            pl.BlockSpec((c_in, c_out), lambda bi, ri: (0, 0)),
            pl.BlockSpec((1, c_out), lambda bi, ri: (0, 0)),
        ],
        out_specs=pl.BlockSpec((TB, TM, c_out), lambda bi, ri: (bi, ri, 0)),
        compiler_params=pltpu.CompilerParams(
            dimension_semantics=("parallel", "parallel"),
            vmem_limit_bytes=_VMEM_LIMIT_BYTES,
        ),
    )(x_flat, adj_bf16, w_t, b2)


def gnn_model_forward(node_feats, adj_matrix, params):
    """GNNModel forward: GCN -> ReLU -> (Dropout) -> ... -> GCN.

    params: list of (weight [c_out, c_in], bias [c_out]) per GCN layer.
    """
    adj_bf16 = adj_matrix.astype(jnp.bfloat16)  # cast once; 0/1 -> exact
    h = node_feats
    n_layers = len(params)
    for i, (w, b) in enumerate(params):
        h = gcn_layer(h, adj_bf16, w, b, apply_relu=(i < n_layers - 1))
        # TODO(synk): nn.Dropout(dp_rate) between hidden layers is identity at
        # inference; training-mode dropout (pltpu.prng_*) not implemented.
    return h


# ----------------------------- pure-JAX reference -----------------------------

def gcn_layer_ref(node_feats, adj_matrix, weight, bias):
    deg = jnp.sum(adj_matrix, axis=-1, keepdims=True)
    h = jnp.einsum("bni,oi->bno", node_feats, weight) + bias
    h = jnp.einsum("bnm,bmo->bno", adj_matrix, h)
    return h / deg


def gnn_model_ref(node_feats, adj_matrix, params):
    h = node_feats
    for i, (w, b) in enumerate(params):
        h = gcn_layer_ref(h, adj_matrix, w, b)
        if i < len(params) - 1:
            h = jax.nn.relu(h)
    return h


if __name__ == "__main__":
    key = jax.random.PRNGKey(0)
    k_x, k_adj, kw1, kb1, kw2, kb2 = jax.random.split(key, 6)

    B, N, c_in, c_hidden, c_out = 2, 8, 32, 32, 16

    node_feats = jax.random.normal(k_x, (B, N, c_in), dtype=jnp.float32)

    # Random 0/1 adjacency with self-loops (as the module docstring assumes).
    adj = (jax.random.uniform(k_adj, (B, N, N)) < 0.3).astype(jnp.float32)
    adj = jnp.maximum(adj, jnp.eye(N, dtype=jnp.float32)[None, :, :])

    # Two-layer GNNModel parameters (nn.Linear layout: [c_out, c_in]).
    w1 = jax.random.normal(kw1, (c_hidden, c_in), dtype=jnp.float32) * 0.1
    b1 = jax.random.normal(kb1, (c_hidden,), dtype=jnp.float32) * 0.1
    w2 = jax.random.normal(kw2, (c_out, c_hidden), dtype=jnp.float32) * 0.1
    b2 = jax.random.normal(kb2, (c_out,), dtype=jnp.float32) * 0.1
    params = [(w1, b1), (w2, b2)]

    out = gnn_model_forward(node_feats, adj, params)
    out = jax.block_until_ready(out)

    ref = gnn_model_ref(node_feats, adj, params)
    assert out.shape == (B, N, c_out)
    # bf16 aggregation inputs + approx reciprocal -> relative error ~1e-3;
    # compare with a matching tolerance.
    err = float(jnp.max(jnp.abs(out - ref)))
    assert jnp.allclose(out, ref, atol=3e-2, rtol=3e-2), err

    print("KERNEL_OK")
</pallas_src>

<mosaic_0001>
module attributes {stable_mosaic.version = 11 : i64} {
  func.func @_gcn_kernel(%arg0: i32, %arg1: i32, %arg2: memref<16x32xf32, #tpu.memory_space<vmem>>, %arg3: memref<2x8x8xbf16, #tpu.memory_space<vmem>>, %arg4: memref<32x32xf32, #tpu.memory_space<vmem>>, %arg5: memref<1x32xf32, #tpu.memory_space<vmem>>, %arg6: memref<2x8x32xf32, #tpu.memory_space<vmem>>) attributes {dimension_semantics = [#tpu.dimension_semantics<parallel>, #tpu.dimension_semantics<parallel>], iteration_bounds = array<i64: 1, 1>, scalar_prefetch = 0 : i64, scratch_operands = 0 : i64, tpu.core_type = #tpu.core_type<tc>, window_params = [{transform_indices = @transform_0, window_bounds = array<i64: 16, 32>}, {transform_indices = @transform_1, window_bounds = array<i64: 2, 8, 8>}, {pipeline_mode = #tpu.pipeline_mode<synchronous>, transform_indices = @transform_2, window_bounds = array<i64: 32, 32>}, {pipeline_mode = #tpu.pipeline_mode<synchronous>, transform_indices = @transform_3, window_bounds = array<i64: 1, 32>}, {transform_indices = @transform_4, window_bounds = array<i64: 2, 8, 32>}]} {
    %c0 = arith.constant 0 : index
    %c0_0 = arith.constant 0 : index
    %0 = vector.load %arg4[%c0, %c0_0] : memref<32x32xf32, #tpu.memory_space<vmem>>, vector<32x32xf32>
    %c0_1 = arith.constant 0 : index
    %c0_2 = arith.constant 0 : index
    %1 = vector.load %arg5[%c0_1, %c0_2] : memref<1x32xf32, #tpu.memory_space<vmem>>, vector<1x32xf32>
    %c0_3 = arith.constant 0 : index
    %c0_4 = arith.constant 0 : index
    %2 = vector.load %arg2[%c0_3, %c0_4] : memref<16x32xf32, #tpu.memory_space<vmem>>, vector<16x32xf32>
    %cst = arith.constant dense<0.000000e+00> : vector<16x32xf32>
    %3 = tpu.matmul %2, %0, %cst {dimension_numbers = #tpu.dot_dimension_numbers<[1], [0], [0], [1], [0, 0, 1, 1], [], []>} : vector<16x32xf32>, vector<32x32xf32>, vector<16x32xf32> -> vector<16x32xf32>
    %4 = arith.truncf %3 : vector<16x32xf32> to vector<16x32xbf16>
    %c0_5 = arith.constant 0 : index
    %c0_6 = arith.constant 0 : index
    %c0_7 = arith.constant 0 : index
    %5 = vector.load %arg3[%c0_5, %c0_6, %c0_7] : memref<2x8x8xbf16, #tpu.memory_space<vmem>>, vector<1x8x8xbf16>
    %6 = vector.shape_cast %5 : vector<1x8x8xbf16> to vector<8x8xbf16>
    %7 = vector.extract_strided_slice %4 {offsets = [0, 0], sizes = [8, 32], strides = [1, 1]} : vector<16x32xbf16> to vector<8x32xbf16>
    %cst_8 = arith.constant dense<0.000000e+00> : vector<8x32xf32>
    %8 = tpu.matmul %6, %7, %cst_8 {dimension_numbers = #tpu.dot_dimension_numbers<[1], [0], [0], [1], [0, 0, 1, 1], [], []>} : vector<8x8xbf16>, vector<8x32xbf16>, vector<8x32xf32> -> vector<8x32xf32>
    %9 = arith.extf %6 : vector<8x8xbf16> to vector<8x8xf32>
    %cst_9 = arith.constant dense<0.000000e+00> : vector<8xf32>
    %10 = vector.multi_reduction <add>, %9, %cst_9 [1] : vector<8x8xf32> to vector<8xf32>
    %11 = vector.shape_cast %10 : vector<8xf32> to vector<8x1xf32>
    %12 = tpu.reciprocal %11 {approx = true} : vector<8x1xf32> -> vector<8x1xf32>
    %13 = vector.broadcast %12 : vector<8x1xf32> to vector<8x32xf32>
    %14 = arith.mulf %8, %13 : vector<8x32xf32>
    %15 = vector.broadcast %1 : vector<1x32xf32> to vector<8x32xf32>
    %16 = arith.addf %14, %15 : vector<8x32xf32>
    %cst_10 = arith.constant 0.000000e+00 : f32
    %17 = vector.broadcast %cst_10 : f32 to vector<8x32xf32>
    %18 = arith.maximumf %16, %17 : vector<8x32xf32>
    %c0_11 = arith.constant 0 : index
    %c0_12 = arith.constant 0 : index
    %c0_13 = arith.constant 0 : index
    %19 = vector.load %arg6[%c0_11, %c0_12, %c0_13] : memref<2x8x32xf32, #tpu.memory_space<vmem>>, vector<1x8x32xf32>
    %20 = vector.shape_cast %19 : vector<1x8x32xf32> to vector<8x32xf32>
    %21 = vector.shape_cast %18 : vector<8x32xf32> to vector<1x8x32xf32>
    tpu.vector_store %arg6[%c0_11, %c0_12, %c0_13], %21 {strides = array<i32>} : memref<2x8x32xf32, #tpu.memory_space<vmem>>, vector<1x8x32xf32>,
    %c1 = arith.constant 1 : index
    %c0_14 = arith.constant 0 : index
    %c0_15 = arith.constant 0 : index
    %22 = vector.load %arg3[%c1, %c0_14, %c0_15] : memref<2x8x8xbf16, #tpu.memory_space<vmem>>, vector<1x8x8xbf16>
    %23 = vector.shape_cast %22 : vector<1x8x8xbf16> to vector<8x8xbf16>
    %24 = vector.extract_strided_slice %4 {offsets = [8, 0], sizes = [8, 32], strides = [1, 1]} : vector<16x32xbf16> to vector<8x32xbf16>
    %cst_16 = arith.constant dense<0.000000e+00> : vector<8x32xf32>
    %25 = tpu.matmul %23, %24, %cst_16 {dimension_numbers = #tpu.dot_dimension_numbers<[1], [0], [0], [1], [0, 0, 1, 1], [], []>} : vector<8x8xbf16>, vector<8x32xbf16>, vector<8x32xf32> -> vector<8x32xf32>
    %26 = arith.extf %23 : vector<8x8xbf16> to vector<8x8xf32>
    %cst_17 = arith.constant dense<0.000000e+00> : vector<8xf32>
    %27 = vector.multi_reduction <add>, %26, %cst_17 [1] : vector<8x8xf32> to vector<8xf32>
    %28 = vector.shape_cast %27 : vector<8xf32> to vector<8x1xf32>
    %29 = tpu.reciprocal %28 {approx = true} : vector<8x1xf32> -> vector<8x1xf32>
    %30 = vector.broadcast %29 : vector<8x1xf32> to vector<8x32xf32>
    %31 = arith.mulf %25, %30 : vector<8x32xf32>
    %32 = vector.broadcast %1 : vector<1x32xf32> to vector<8x32xf32>
    %33 = arith.addf %31, %32 : vector<8x32xf32>
    %cst_18 = arith.constant 0.000000e+00 : f32
    %34 = vector.broadcast %cst_18 : f32 to vector<8x32xf32>
    %35 = arith.maximumf %33, %34 : vector<8x32xf32>
    %c1_19 = arith.constant 1 : index
    %c0_20 = arith.constant 0 : index
    %c0_21 = arith.constant 0 : index
    %36 = vector.load %arg6[%c1_19, %c0_20, %c0_21] : memref<2x8x32xf32, #tpu.memory_space<vmem>>, vector<1x8x32xf32>
    %37 = vector.shape_cast %36 : vector<1x8x32xf32> to vector<8x32xf32>
    %38 = vector.shape_cast %35 : vector<8x32xf32> to vector<1x8x32xf32>
    tpu.vector_store %arg6[%c1_19, %c0_20, %c0_21], %38 {strides = array<i32>} : memref<2x8x32xf32, #tpu.memory_space<vmem>>, vector<1x8x32xf32>,
    return
  }
  func.func @transform_0(%arg0: i32, %arg1: i32) -> (i32, i32) {
    %c0_i32 = arith.constant 0 : i32
    %c0_i32_0 = arith.constant 0 : i32
    return %arg0, %c0_i32 : i32, i32
  }
  func.func @transform_1(%arg0: i32, %arg1: i32) -> (i32, i32, i32) {
    %c0_i32 = arith.constant 0 : i32
    %c0_i32_0 = arith.constant 0 : i32
    return %arg0, %arg1, %c0_i32 : i32, i32, i32
  }
  func.func @transform_2(%arg0: i32, %arg1: i32) -> (i32, i32) {
    %c0_i32 = arith.constant 0 : i32
    %c0_i32_0 = arith.constant 0 : i32
    %c0_i32_1 = arith.constant 0 : i32
    return %c0_i32, %c0_i32_0 : i32, i32
  }
  func.func @transform_3(%arg0: i32, %arg1: i32) -> (i32, i32) {
    %c0_i32 = arith.constant 0 : i32
    %c0_i32_0 = arith.constant 0 : i32
    %c0_i32_1 = arith.constant 0 : i32
    return %c0_i32, %c0_i32_0 : i32, i32
  }
  func.func @transform_4(%arg0: i32, %arg1: i32) -> (i32, i32, i32) {
    %c0_i32 = arith.constant 0 : i32
    %c0_i32_0 = arith.constant 0 : i32
    return %arg0, %arg1, %c0_i32 : i32, i32, i32
  }
}

</mosaic_0001>

<llo_original>
// kernel: tpu_custom_call.1
$region0: #{tpu_custom_call.1}
  #allocation0 [shape = 'u32[]', space=smem, size = 0x4, offset = 0x4, fixed_abs, tag = 'smem constant byte address 0x4 - core index']
  #allocation1 [shape = 'u32[144,128]{1,0:T(1,128)}', space=vmem, size = 0x12000, scoped, tag = 'internal scratch']
  %s0 = inlined_call_operand.hbm [shape: f32[16,32], index: 0, kind: input, shape index: {}]
  %s1 = inlined_call_operand.hbm [shape: bf16[2,8,8], index: 1, kind: input, shape index: {}]
  %s2 = inlined_call_operand.hbm [shape: f32[32,32], index: 2, kind: input, shape index: {}]
  %s3 = inlined_call_operand.vmem [shape: f32[1,32], index: 3, kind: input, shape index: {}]
  %s4 = inlined_call_operand.hbm [shape: f32[2,8,32], index: 4, kind: output, shape index: {}]
  %s5 = sld [smem:[#allocation0]]
  $region38: #{tpu_custom_call.1} parent=0
    _
  %s7 = ssub.s32 1, %s5
  %s8 = scalar_select 0, %s7, %s5
  $region1: #{tpu_custom_call.1} parent=0
    #allocation2 [shape = 'u8[8192]{0}', space=vmem, size = 0x2000, scoped, tag = 'input window, operand 0, single buffered']
    #allocation3 [shape = 's32[1]{0}', space=sflag, size = 0x4, scoped, tag = 'scoped memory for tpu_custom_call.1']
    #allocation4 [shape = 's32[1]{0}', space=sflag, size = 0x4, scoped, tag = 'scoped memory for tpu_custom_call.1']
    #allocation5 [shape = 'u8[4096]{0}', space=vmem, size = 0x1000, scoped, tag = 'input window, operand 1, single buffered']
    #allocation6 [shape = 's32[1]{0}', space=sflag, size = 0x4, scoped, tag = 'scoped memory for tpu_custom_call.1']
    #allocation7 [shape = 'u8[16384]{0}', space=vmem, size = 0x4000, scoped, tag = 'input window, operand 2, single buffered']
    #allocation8 [shape = 'u8[8192]{0}', space=vmem, size = 0x2000, scoped, tag = 'output window, operand 0, single buffered']
    %9 = vsyncpa [#allocation3], 0
    %10 = vsyncpa [#allocation6], 0
    %11 = vsyncpa [#allocation4], 0
    // Predicated region
    $region2: #{tpu_custom_call.1} parent=1 // pred_check
      _
    $region3: #{tpu_custom_call.1} parent=1 // pred_check_branch
      %13 = sbr.rel (0) target = $region5
    $region4: #{tpu_custom_call.1} parent=1 // pred_region
      %s15 = ssub.s32 256, 256
      %16 = vsyncadd [#allocation3], %s15
      %s17 = sshll.u32 [#allocation2], 4
      %s18 = int_to_ptr.vmem [resolvable:$true] %s17
      %23 = dma.hbm_to_vmem [thread:$0]  %s0, 256, %s18, [#allocation3], 128, 128, 8
    $region5: #{tpu_custom_call.1} parent=1 // pred_fallthru
      _
    // Predicated region
    $region6: #{tpu_custom_call.1} parent=1 // pred_check
      _
    $region7: #{tpu_custom_call.1} parent=1 // pred_check_branch
      %25 = sbr.rel (0) target = $region9
    $region8: #{tpu_custom_call.1} parent=1 // pred_region
      %s27 = ssub.s32 128, 128
      %28 = vsyncadd [#allocation6], %s27
      %s29 = sshll.u32 [#allocation5], 4
      %s30 = int_to_ptr.vmem [resolvable:$true] %s29
      %35 = dma.hbm_to_vmem [thread:$0]  %s1, 128, %s30, [#allocation6], 64, 64, 4
    $region9: #{tpu_custom_call.1} parent=1 // pred_fallthru
      _
    // Predicated region
    $region10: #{tpu_custom_call.1} parent=1 // pred_check
      _
    $region11: #{tpu_custom_call.1} parent=1 // pred_check_branch
      %37 = sbr.rel (0) target = $region13
    $region12: #{tpu_custom_call.1} parent=1 // pred_region
      %s39 = ssub.s32 512, 512
      %40 = vsyncadd [#allocation6], %s39
      %s41 = sshll.u32 [#allocation7], 4
      %s42 = int_to_ptr.vmem [resolvable:$true] %s41
      %47 = dma.hbm_to_vmem [thread:$0]  %s2, 512, %s42, [#allocation6], 128, 128, 8
    $region13: #{tpu_custom_call.1} parent=1 // pred_fallthru
      _
    // Predicated region
    $region14: #{tpu_custom_call.1} parent=1 // pred_check
      _
    $region15: #{tpu_custom_call.1} parent=1 // pred_check_branch
      %49 = sbr.rel (0) target = $region17
    $region16: #{tpu_custom_call.1} parent=1 // pred_region
      _
    $region17: #{tpu_custom_call.1} parent=1 // pred_fallthru
      _
    // Predicated region
    $region18: #{tpu_custom_call.1} parent=1 // pred_check
      _
    $region19: #{tpu_custom_call.1} parent=1 // pred_check_branch
      %51 = sbr.rel (0) target = $region21
    $region20: #{tpu_custom_call.1} parent=1 // pred_region
      %52 = dma.done [#allocation3], 256
    $region21: #{tpu_custom_call.1} parent=1 // pred_fallthru
      _
    // Predicated region
    $region22: #{tpu_custom_call.1} parent=1 // pred_check
      _
    $region23: #{tpu_custom_call.1} parent=1 // pred_check_branch
      %54 = sbr.rel (0) target = $region25
    $region24: #{tpu_custom_call.1} parent=1 // pred_region
      %55 = dma.done [#allocation6], 128
    $region25: #{tpu_custom_call.1} parent=1 // pred_fallthru
      _
    // Predicated region
    $region26: #{tpu_custom_call.1} parent=1 // pred_check
      _
    $region27: #{tpu_custom_call.1} parent=1 // pred_check_branch
      %57 = sbr.rel (0) target = $region29
    $region28: #{tpu_custom_call.1} parent=1 // pred_region
      %58 = dma.done [#allocation6], 512
    $region29: #{tpu_custom_call.1} parent=1 // pred_fallthru
      _
    %v60 = vld [vmem:[#allocation7] sm:$0xff]
    %v61 = vld [vmem:[#allocation7 + $0x8] sm:$0xff]
    %v62 = vld [vmem:[#allocation7 + $0x10] sm:$0xff]
    %v63 = vld [vmem:[#allocation7 + $0x18] sm:$0xff]
    %v64 = vld [vmem:[%s3] sm:$0x1]
    %v65 = vld [vmem:[#allocation2] sm:$0xff]
    %v66 = vld [vmem:[#allocation2 + $0x8] sm:$0xff]
    %vm67 = vcmask 261120
    %v69 = vsel %vm67, %v65, 0
    %v72 = vsel %vm67, %v66, 0
    %74 = vmatprep.subr.mxu0 0.0
    %75 = vmatpush1.msra.mxu0 %v60
    %76 = vmatprep.subr.mxu0 0.0
    %77 = vmatpush1.msra.mxu0 %v61
    %78 = vmatprep.subr.mxu0 0.0
    %79 = vmatpush1.msra.mxu0 %v62
    %80 = vmatprep.subr.mxu0 0.0
    %81 = vmatpush1.msra.mxu0 %v63
    %82 = vmatprep.subr.mxu0 0.0
    %83 = vmatpush1.msra.mxu0 0.0
    %84 = vmatprep.subr.mxu0 0.0
    %85 = vmatpush1.msra.mxu0 0.0
    %86 = vmatprep.subr.mxu0 0.0
    %87 = vmatpush1.msra.mxu0 0.0
    %88 = vmatprep.subr.mxu0 0.0
    %89 = vmatpush1.msra.mxu0 0.0
    %90 = vmatprep.subr.mxu0 0.0
    %91 = vmatpush1.msra.mxu0 0.0
    %92 = vmatprep.subr.mxu0 0.0
    %93 = vmatpush1.msra.mxu0 0.0
    %94 = vmatprep.subr.mxu0 0.0
    %95 = vmatpush1.msra.mxu0 0.0
    %96 = vmatprep.subr.mxu0 0.0
    %97 = vmatpush1.msra.mxu0 0.0
    %98 = vmatprep.subr.mxu0 0.0
    %99 = vmatpush1.msra.mxu0 0.0
    %100 = vmatprep.subr.mxu0 0.0
    %101 = vmatpush1.msra.mxu0 0.0
    %102 = vmatprep.subr.mxu0 0.0
    %103 = vmatpush1.msra.mxu0 0.0
    %104 = vmatprep.subr.mxu0 0.0
    %105 = vmatpush1.msra.mxu0 0.0
    %106 = vmatprep.subr.mxu0 0.0
    %107 = vmatpush1.msra.mxu0 0.0
    %108 = vmatprep.subr.mxu0 0.0
    %109 = vmatpush1.msra.mxu0 0.0
    %110 = vmatprep.subr.mxu0 0.0
    %111 = vmatpush1.msra.mxu0 0.0
    %112 = vmatprep.subr.mxu0 0.0
    %113 = vmatpush1.msra.mxu0 0.0
    %114 = vmatprep.subr.mxu0 0.0
    %115 = vmatpush1.msra.mxu0 0.0
    %116 = vmatprep.subr.mxu0 0.0
    %117 = vmatpush1.msra.mxu0 0.0
    %118 = vmatprep.subr.mxu0 0.0
    %119 = vmatpush1.msra.mxu0 0.0
    %120 = vmatprep.subr.mxu0 0.0
    %121 = vmatpush1.msra.mxu0 0.0
    %122 = vmatprep.subr.mxu0 0.0
    %123 = vmatpush1.msra.mxu0 0.0
    %124 = vmatprep.subr.mxu0 0.0
    %125 = vmatpush1.msra.mxu0 0.0
    %126 = vmatprep.subr.mxu0 0.0
    %127 = vmatpush1.msra.mxu0 0.0
    %128 = vmatprep.subr.mxu0 0.0
    %129 = vmatpush1.msra.mxu0 0.0
    %130 = vmatprep.subr.mxu0 0.0
    %131 = vmatpush1.msra.mxu0 0.0
    %132 = vmatprep.subr.mxu0 0.0
    %133 = vmatpush1.msra.mxu0 0.0
    %134 = vmatprep.subr.mxu0 0.0
    %135 = vmatpush1.msra.mxu0 0.0
    %136 = vmatprep.subr.mxu0 0.0
    %137 = vmatpush1.msra.mxu0 0.0
    %138 = vmatprep.mubr.f32.mxu0 0.0
    %139 = vmatmul.mubr.f32.gmra.mrb[0].mxu0 %v69
    %v140 = vpop.f32.mrb[0].mxu0
    %v141 = vadd.f32 0.0, %v140
    %v142 = vpop.f32.mrb[0].mxu0
    %143 = vmatprep.mubr.f32.mxu0 0.0
    %144 = vmatmul.mubr.f32.gmra.mrb[0].mxu0 %v72
    %v145 = vpop.f32.mrb[0].mxu0
    %v146 = vadd.f32 0.0, %v145
    %v147 = vpop.f32.mrb[0].mxu0
    %148 = vdwg.mxu0
    %v149 = vpack.c.bf16 %v146, %v141
    %v150 = vld [vmem:[#allocation5] sm:$0xf]
    %vm151 = vcmask 64512
    %v153 = vsel %vm151, %v150, 0
    %vm155 = vcmask 1043456
    %v157 = vsel %vm155, %v149, 0
    %159 = vmatprep.subr.bf16.mxu0 0
    %160 = vmatpush1.bf16.msra.mxu0 %v157
    %161 = vmatprep.subr.bf16.mxu0 0
    %162 = vmatpush1.bf16.msra.mxu0 0
    %163 = vmatprep.subr.bf16.mxu0 0
    %164 = vmatpush1.bf16.msra.mxu0 0
    %165 = vmatprep.subr.bf16.mxu0 0
    %166 = vmatpush1.bf16.msra.mxu0 0
    %167 = vmatprep.subr.bf16.mxu0 0
    %168 = vmatpush1.bf16.msra.mxu0 0
    %169 = vmatprep.subr.bf16.mxu0 0
    %170 = vmatpush1.bf16.msra.mxu0 0
    %171 = vmatprep.subr.bf16.mxu0 0
    %172 = vmatpush1.bf16.msra.mxu0 0
    %173 = vmatprep.subr.bf16.mxu0 0
    %174 = vmatpush1.bf16.msra.mxu0 0
    %175 = vmatprep.subr.bf16.mxu0 0
    %176 = vmatpush1.bf16.msra.mxu0 0
    %177 = vmatprep.subr.bf16.mxu0 0
    %178 = vmatpush1.bf16.msra.mxu0 0
    %179 = vmatprep.subr.bf16.mxu0 0
    %180 = vmatpush1.bf16.msra.mxu0 0
    %181 = vmatprep.subr.bf16.mxu0 0
    %182 = vmatpush1.bf16.msra.mxu0 0
    %183 = vmatprep.subr.bf16.mxu0 0
    %184 = vmatpush1.bf16.msra.mxu0 0
    %185 = vmatprep.subr.bf16.mxu0 0
    %186 = vmatpush1.bf16.msra.mxu0 0
    %187 = vmatprep.subr.bf16.mxu0 0
    %188 = vmatpush1.bf16.msra.mxu0 0
    %189 = vmatprep.subr.bf16.mxu0 0
    %190 = vmatpush1.bf16.msra.mxu0 0
    %191 = vmatprep.mubr.bf16.mxu0 0
    %192 = vmatmul.mubr.bf16.gmra.mrb[0].mxu0 %v153
    %v193 = vpop.f32.mrb[0].mxu0
    %v194 = vadd.f32 0.0, %v193
    %v195 = vpop.f32.mrb[0].mxu0
    %v196 = vpop.f32.mrb[0].mxu0
    %v197 = vpop.f32.mrb[0].mxu0
    %198 = vdwg.mxu0
    %v199 = vunpack.c.l.bf16 %v150
    %v200 = vsel %vm151, %v199, 0.0
    %201 = vadd.xlane.f32.xlu0 %v200
    %v202 = vpop.xlane.xlu0 %201
    %v203 = vrcp.pop %v202
    %v204 = vmul.f32 %v194, %v203
    %v206 = vlaneseq
    %v207 = vshrl.u32 %v206, 7
    %v208 = vsub.s32 0, %v207
    %v209 = vrot.slane %v64, %v208
    %v211 = vadd.f32 %v204, %v209
    %v212 = vmax.f32 %v211, 0.0
    %213 = vst.msk [vmem:[#allocation8] sm:$0xff] %vm67, %v212
    %s214 = scalar_lea.vmem [#allocation5], 4
    %v215 = vld [vmem:[%s214] sm:$0xf]
    %v217 = vrot.slane %v149, 4
    %v219 = vsel %vm151, %v215, 0
    %v222 = vsel %vm155, %v217, 0
    %224 = vmatprep.subr.bf16.mxu0 0
    %225 = vmatpush1.bf16.msra.mxu0 %v222
    %226 = vmatprep.subr.bf16.mxu0 0
    %227 = vmatpush1.bf16.msra.mxu0 0
    %228 = vmatprep.subr.bf16.mxu0 0
    %229 = vmatpush1.bf16.msra.mxu0 0
    %230 = vmatprep.subr.bf16.mxu0 0
    %231 = vmatpush1.bf16.msra.mxu0 0
    %232 = vmatprep.subr.bf16.mxu0 0
    %233 = vmatpush1.bf16.msra.mxu0 0
    %234 = vmatprep.subr.bf16.mxu0 0
    %235 = vmatpush1.bf16.msra.mxu0 0
    %236 = vmatprep.subr.bf16.mxu0 0
    %237 = vmatpush1.bf16.msra.mxu0 0
    %238 = vmatprep.subr.bf16.mxu0 0
    %239 = vmatpush1.bf16.msra.mxu0 0
    %240 = vmatprep.subr.bf16.mxu0 0
    %241 = vmatpush1.bf16.msra.mxu0 0
    %242 = vmatprep.subr.bf16.mxu0 0
    %243 = vmatpush1.bf16.msra.mxu0 0
    %244 = vmatprep.subr.bf16.mxu0 0
    %245 = vmatpush1.bf16.msra.mxu0 0
    %246 = vmatprep.subr.bf16.mxu0 0
    %247 = vmatpush1.bf16.msra.mxu0 0
    %248 = vmatprep.subr.bf16.mxu0 0
    %249 = vmatpush1.bf16.msra.mxu0 0
    %250 = vmatprep.subr.bf16.mxu0 0
    %251 = vmatpush1.bf16.msra.mxu0 0
    %252 = vmatprep.subr.bf16.mxu0 0
    %253 = vmatpush1.bf16.msra.mxu0 0
    %254 = vmatprep.subr.bf16.mxu0 0
    %255 = vmatpush1.bf16.msra.mxu0 0
    %256 = vmatprep.mubr.bf16.mxu0 0
    %257 = vmatmul.mubr.bf16.gmra.mrb[0].mxu0 %v219
    %v258 = vpop.f32.mrb[0].mxu0
    %v259 = vadd.f32 0.0, %v258
    %v260 = vpop.f32.mrb[0].mxu0
    %v261 = vpop.f32.mrb[0].mxu0
    %v262 = vpop.f32.mrb[0].mxu0
    %263 = vdwg.mxu0
    %v264 = vunpack.c.l.bf16 %v215
    %v265 = vsel %vm151, %v264, 0.0
    %266 = vadd.xlane.f32.xlu0 %v265
    %v267 = vpop.xlane.xlu0 %266
    %v268 = vrcp.pop %v267
    %v269 = vmul.f32 %v259, %v268
    %v270 = vadd.f32 %v269, %v209
    %v271 = vmax.f32 %v270, 0.0
    %s272 = scalar_lea.vmem [#allocation8], 8
    %273 = vst.msk [vmem:[%s272] sm:$0xff] %vm67, %v271
    // Predicated region
    $region30: #{tpu_custom_call.1} parent=1 // pred_check
      _
    $region31: #{tpu_custom_call.1} parent=1 // pred_check_branch
      %275 = sbr.rel (0) target = $region33
    $region32: #{tpu_custom_call.1} parent=1 // pred_region
      %s277 = ssub.s32 256, 256
      %278 = vsyncadd [#allocation4], %s277
      %s279 = sshll.u32 [#allocation8], 4
      %s280 = int_to_ptr.vmem [resolvable:$true] %s279
      %285 = dma.vmem_to_hbm [thread:$0]  %s280, 256, %s4, [#allocation4], 128, 128, 8
    $region33: #{tpu_custom_call.1} parent=1 // pred_fallthru
      _
    // Predicated region
    $region34: #{tpu_custom_call.1} parent=1 // pred_check
      _
    $region35: #{tpu_custom_call.1} parent=1 // pred_check_branch
      %287 = sbr.rel (0) target = $region37
    $region36: #{tpu_custom_call.1} parent=1 // pred_region
      %288 = dma.done [#allocation4], 256
    $region37: #{tpu_custom_call.1} parent=1 // pred_fallthru
      _
    %289 = vsyncpa [#allocation3], 1
    %290 = vsyncpa [#allocation6], 1
    %291 = vsyncpa [#allocation4], 1

</llo_original>
